<compile_context>
chip_gen: v5e
topology: v5e:2x2
jax: 0.10.0
libtpu: 0.0.40
codegen_flags: <defaults>
</compile_context>

<pallas_src>
import math
import functools

import jax
import jax.numpy as jnp
from jax.experimental import pallas as pl
from jax.experimental.pallas import tpu as pltpu


def _round_up(x, m):
    return ((x + m - 1) // m) * m


def _vmem_cap_bytes():
    """Generation-aware VMEM cap with headroom for Mosaic internal scratch."""
    try:
        cap = int(pltpu.get_tpu_info().vmem_capacity_bytes)
    except Exception:
        cap = 64 << 20  # conservative fallback (v7x-sized)
    return int(0.85 * cap)


# ---------------------------------------------------------------------------
# Kernel: one token-tile (i) x one hidden-chunk (j) step of fc1->gelu->fc2.
# ---------------------------------------------------------------------------
def _caption_mlp_kernel(x_ref, w1_ref, b1_ref, w2_ref, b2_ref, o_ref, acc_ref):
    j = pl.program_id(1)

    @pl.when(j == 0)
    def _():
        acc_ref[...] = jnp.zeros_like(acc_ref)

    # fc1 chunk: native-dtype operands on the MXU, f32 accumulation.
    h = jnp.dot(x_ref[...], w1_ref[...], preferred_element_type=jnp.float32)
    h = h + b1_ref[...].astype(jnp.float32)          # fused bias add on the f32 acc

    # gelu (tanh approximation -- matches TRT-LLM ACT2FN['gelu']); f32 math,
    # tanh lands on the EUP, polynomial stays on the VPU.
    c = math.sqrt(2.0 / math.pi)
    h = 0.5 * h * (1.0 + jnp.tanh(c * (h + 0.044715 * h * h * h)))

    # inner_layernorm is None by default (inner_layernorm=False) -> skipped.
    # TODO(synk): add optional LayerNorm(hidden) path if inner_layernorm=True is needed.

    # fc2 chunk: downcast h to the weight dtype at the dot input (bf16 MXU path),
    # accumulate over hidden chunks in the f32 VMEM scratch.
    acc_ref[...] += jnp.dot(h.astype(w2_ref.dtype), w2_ref[...],
                            preferred_element_type=jnp.float32)

    @pl.when(j == pl.num_programs(1) - 1)
    def _():
        o_ref[...] = (acc_ref[...] + b2_ref[...].astype(jnp.float32)).astype(o_ref.dtype)


# ---------------------------------------------------------------------------
# Tile selection: token tile tm (mult of 16), hidden chunk th (128-mult divisor
# of D_hid_p), fitted to the generation-aware VMEM cap.
# ---------------------------------------------------------------------------
def _choose_tiles(M, D_in_p, D_hid_p, D_out_p, xbytes, wbytes, cap):
    tm = max(16, min(512, _round_up(M, 16)))
    M_p = _round_up(M, tm)
    # >=2 grid steps along M lets v7x shard the parallel axis across both TCs.
    while M_p // tm < 2 and tm >= 32:
        tm //= 2
        M_p = _round_up(M, tm)

    nblk = D_hid_p // 128
    divisors = sorted({d for d in range(1, nblk + 1) if nblk % d == 0}, reverse=True)

    def budget(tm_, th_):
        n_chunks = D_hid_p // th_
        nbuf_w = 1 if n_chunks == 1 else 2            # single-buffer resident weights
        b = 2 * tm_ * D_in_p * xbytes                 # x tile (double-buffered)
        b += nbuf_w * (D_in_p * th_ + th_ * D_out_p) * wbytes
        b += nbuf_w * th_ * 4 + D_out_p * 4           # biases
        b += 2 * tm_ * D_out_p * xbytes               # out tile (double-buffered)
        b += tm_ * D_out_p * 4                        # f32 accumulator scratch
        b += tm_ * th_ * 4                            # f32 h intermediate
        return int(b * 1.2)                           # headroom

    th = 128
    while True:
        found = False
        for d in divisors:
            th_c = d * 128
            if budget(tm, th_c) <= cap:
                th = th_c
                found = True
                break
        if found or tm <= 16:
            break
        tm = max(16, tm // 2)
        M_p = _round_up(M, tm)

    return tm, M_p, th, budget(tm, th)


def _spec(shape, index_map, mode=None):
    if mode is None:
        return pl.BlockSpec(shape, index_map)
    return pl.BlockSpec(shape, index_map, pipeline_mode=mode)


# ---------------------------------------------------------------------------
# Wrapper
# ---------------------------------------------------------------------------
def prepare_caption_mlp_params(w1, b1, w2, b2):
    """One-time (model-init) padding of weights/biases to lane-dense 128-multiples."""
    D_in, D_hid = w1.shape
    D_out = w2.shape[1]
    D_in_p, D_hid_p, D_out_p = (_round_up(d, 128) for d in (D_in, D_hid, D_out))
    b1 = jnp.reshape(b1, (1, D_hid))
    b2 = jnp.reshape(b2, (1, D_out))
    if D_in_p != D_in or D_hid_p != D_hid:
        w1 = jnp.pad(w1, ((0, D_in_p - D_in), (0, D_hid_p - D_hid)))
    if D_hid_p != D_hid:
        b1 = jnp.pad(b1, ((0, 0), (0, D_hid_p - D_hid)))
    if D_hid_p != D_hid or D_out_p != D_out:
        w2 = jnp.pad(w2, ((0, D_hid_p - D_hid), (0, D_out_p - D_out)))
    if D_out_p != D_out:
        b2 = jnp.pad(b2, ((0, 0), (0, D_out_p - D_out)))
    return {"w1": w1, "b1": b1, "w2": w2, "b2": b2,
            "d_in": D_in, "d_hid": D_hid, "d_out": D_out}


@functools.partial(jax.jit, static_argnames=("d_out",))
def _caption_mlp_impl(hidden_states, w1_p, b1_p, w2_p, b2_p, *, d_out):
    B, S, D_in = hidden_states.shape
    M = B * S
    x2d = hidden_states.reshape(M, D_in)

    D_in_p, D_hid_p = w1_p.shape
    D_out_p = w2_p.shape[1]

    xbytes = jnp.dtype(hidden_states.dtype).itemsize
    wbytes = jnp.dtype(w1_p.dtype).itemsize
    cap = _vmem_cap_bytes()
    tm, M_p, th, need = _choose_tiles(M, D_in_p, D_hid_p, D_out_p, xbytes, wbytes, cap)

    # Activation padding (skipped entirely when not needed).
    pad_m, pad_d = M_p - M, D_in_p - D_in
    x_p = x2d if (pad_m == 0 and pad_d == 0) else jnp.pad(x2d, ((0, pad_m), (0, pad_d)))

    n_chunks = D_hid_p // th
    grid = (M_p // tm, n_chunks)

    resident = pl.Buffered(1)                        # grid-invariant: single buffer
    w_mode = resident if n_chunks == 1 else None     # chunked weights need pipelining

    cost = pl.CostEstimate(
        flops=2 * M_p * (D_in_p * D_hid_p + D_hid_p * D_out_p),
        transcendentals=M_p * D_hid_p,
        bytes_accessed=(x_p.size * xbytes
                        + (w1_p.size + w2_p.size + b1_p.size + b2_p.size) * wbytes
                        + M_p * D_out_p * xbytes),
    )

    vmem_limit = min(cap, max(need, 32 << 20))

    out2d = pl.pallas_call(
        _caption_mlp_kernel,
        out_shape=jax.ShapeDtypeStruct((M_p, D_out_p), hidden_states.dtype),
        grid_spec=pltpu.PrefetchScalarGridSpec(
            num_scalar_prefetch=0,
            grid=grid,
            in_specs=[
                _spec((tm, D_in_p), lambda i, j: (i, 0)),                # x tile
                _spec((D_in_p, th), lambda i, j: (0, j), w_mode),        # w1 chunk
                _spec((1, th), lambda i, j: (0, j), w_mode),             # b1 chunk
                _spec((th, D_out_p), lambda i, j: (j, 0), w_mode),       # w2 chunk
                _spec((1, D_out_p), lambda i, j: (0, 0), resident),      # b2
            ],
            out_specs=pl.BlockSpec((tm, D_out_p), lambda i, j: (i, 0)),
            scratch_shapes=[pltpu.VMEM((tm, D_out_p), jnp.float32)],     # f32 acc
        ),
        compiler_params=pltpu.CompilerParams(
            dimension_semantics=("parallel", "arbitrary"),
            vmem_limit_bytes=vmem_limit),
        cost_estimate=cost,
    )(x_p, w1_p, b1_p, w2_p, b2_p)

    if M_p != M or D_out_p != d_out:
        out2d = out2d[:M, :d_out]
    return out2d.reshape(B, S, d_out)


def caption_mlp(hidden_states, params):
    """hidden_states: (B, S, D_in); params from prepare_caption_mlp_params."""
    return _caption_mlp_impl(hidden_states, params["w1"], params["b1"],
                             params["w2"], params["b2"], d_out=params["d_out"])


def _reference(hidden_states, w1, b1, w2, b2):
    x = hidden_states.astype(jnp.float32)
    h = x @ w1.astype(jnp.float32) + b1.astype(jnp.float32)
    c = math.sqrt(2.0 / math.pi)
    h = 0.5 * h * (1.0 + jnp.tanh(c * (h + 0.044715 * h ** 3)))
    out = h @ w2.astype(jnp.float32) + b2.astype(jnp.float32)
    return out


if __name__ == "__main__":
    # Small shapes consistent with CaptionMLP(in_features, hidden_features, out_features)
    batch, seq = 2, 8
    in_features = 32
    hidden_features = 64
    out_features = 32       # defaults to in_features in the module

    key = jax.random.PRNGKey(0)
    kx, k1, kb1, k2, kb2 = jax.random.split(key, 5)

    dtype = jnp.bfloat16   # exercise the native bf16 MXU path
    x = jax.random.normal(kx, (batch, seq, in_features), dtype=jnp.float32).astype(dtype)
    # fc1: ColumnLinear(in_features, hidden_features) -> weight (in, hidden) in our layout
    w1 = (jax.random.normal(k1, (in_features, hidden_features), dtype=jnp.float32) * 0.05).astype(dtype)
    b1 = (jax.random.normal(kb1, (1, hidden_features), dtype=jnp.float32) * 0.01).astype(dtype)
    # fc2: RowLinear(hidden_features, out_features) -> weight (hidden, out) in our layout
    w2 = (jax.random.normal(k2, (hidden_features, out_features), dtype=jnp.float32) * 0.05).astype(dtype)
    b2 = (jax.random.normal(kb2, (1, out_features), dtype=jnp.float32) * 0.01).astype(dtype)

    params = prepare_caption_mlp_params(w1, b1, w2, b2)   # one-time weight padding
    out = caption_mlp(x, params)
    out = jax.block_until_ready(out)

    ref = _reference(x, w1, b1, w2, b2)
    assert out.shape == (batch, seq, out_features)
    # bf16 operands + f32 accumulation vs full-f32 reference: loose tolerance.
    assert jnp.allclose(out.astype(jnp.float32), ref, atol=3e-2, rtol=3e-2), \
        "mismatch vs reference"

    print("KERNEL_OK")
</pallas_src>

<mosaic_0001>
module attributes {stable_mosaic.version = 11 : i64} {
  func.func @_caption_mlp_kernel(%arg0: i32, %arg1: i32, %arg2: memref<16x128xbf16, #tpu.memory_space<vmem>>, %arg3: memref<128x128xbf16, #tpu.memory_space<vmem>>, %arg4: memref<1x128xbf16, #tpu.memory_space<vmem>>, %arg5: memref<128x128xbf16, #tpu.memory_space<vmem>>, %arg6: memref<1x128xbf16, #tpu.memory_space<vmem>>, %arg7: memref<16x128xbf16, #tpu.memory_space<vmem>>, %arg8: memref<16x128xf32, #tpu.memory_space<vmem>>) attributes {dimension_semantics = [#tpu.dimension_semantics<parallel>, #tpu.dimension_semantics<arbitrary>], iteration_bounds = array<i64: 1, 1>, scalar_prefetch = 0 : i64, scratch_operands = 1 : i64, tpu.core_type = #tpu.core_type<tc>, window_params = [{transform_indices = @transform_0, window_bounds = array<i64: 16, 128>}, {pipeline_mode = #tpu.pipeline_mode<synchronous>, transform_indices = @transform_1, window_bounds = array<i64: 128, 128>}, {pipeline_mode = #tpu.pipeline_mode<synchronous>, transform_indices = @transform_2, window_bounds = array<i64: 1, 128>}, {pipeline_mode = #tpu.pipeline_mode<synchronous>, transform_indices = @transform_3, window_bounds = array<i64: 128, 128>}, {pipeline_mode = #tpu.pipeline_mode<synchronous>, transform_indices = @transform_4, window_bounds = array<i64: 1, 128>}, {transform_indices = @transform_5, window_bounds = array<i64: 16, 128>}]} {
    %c0_i32 = arith.constant 0 : i32
    %0 = arith.cmpi eq, %arg1, %c0_i32 : i32
    %1 = arith.extui %0 : i1 to i32
    %c0_i32_0 = arith.constant 0 : i32
    %2 = arith.cmpi ne, %1, %c0_i32_0 : i32
    scf.if %2 {
      %cst_19 = arith.constant 0.000000e+00 : f32
      %32 = vector.broadcast %cst_19 : f32 to vector<16x128xf32>
      %c0_20 = arith.constant 0 : index
      %c0_21 = arith.constant 0 : index
      %33 = vector.load %arg8[%c0_20, %c0_21] : memref<16x128xf32, #tpu.memory_space<vmem>>, vector<16x128xf32>
      tpu.vector_store %arg8[%c0_20, %c0_21], %32 {strides = array<i32>} : memref<16x128xf32, #tpu.memory_space<vmem>>, vector<16x128xf32>,
    } else {
    }
    %c0 = arith.constant 0 : index
    %c0_1 = arith.constant 0 : index
    %3 = vector.load %arg2[%c0, %c0_1] : memref<16x128xbf16, #tpu.memory_space<vmem>>, vector<16x128xbf16>
    %c0_2 = arith.constant 0 : index
    %c0_3 = arith.constant 0 : index
    %4 = vector.load %arg3[%c0_2, %c0_3] : memref<128x128xbf16, #tpu.memory_space<vmem>>, vector<128x128xbf16>
    %cst = arith.constant dense<0.000000e+00> : vector<16x128xf32>
    %5 = tpu.matmul %3, %4, %cst {dimension_numbers = #tpu.dot_dimension_numbers<[1], [0], [0], [1], [0, 0, 1, 1], [], []>} : vector<16x128xbf16>, vector<128x128xbf16>, vector<16x128xf32> -> vector<16x128xf32>
    %c0_4 = arith.constant 0 : index
    %c0_5 = arith.constant 0 : index
    %6 = vector.load %arg4[%c0_4, %c0_5] : memref<1x128xbf16, #tpu.memory_space<vmem>>, vector<1x128xbf16>
    %7 = arith.extf %6 : vector<1x128xbf16> to vector<1x128xf32>
    %8 = vector.broadcast %7 : vector<1x128xf32> to vector<16x128xf32>
    %9 = arith.addf %5, %8 : vector<16x128xf32>
    %cst_6 = arith.constant 5.000000e-01 : f32
    %10 = vector.broadcast %cst_6 : f32 to vector<16x128xf32>
    %11 = arith.mulf %10, %9 : vector<16x128xf32>
    %cst_7 = arith.constant 4.471500e-02 : f32
    %12 = vector.broadcast %cst_7 : f32 to vector<16x128xf32>
    %13 = arith.mulf %12, %9 : vector<16x128xf32>
    %14 = arith.mulf %13, %9 : vector<16x128xf32>
    %15 = arith.mulf %14, %9 : vector<16x128xf32>
    %16 = arith.addf %9, %15 : vector<16x128xf32>
    %cst_8 = arith.constant 0.797884583 : f32
    %17 = vector.broadcast %cst_8 : f32 to vector<16x128xf32>
    %18 = arith.mulf %17, %16 : vector<16x128xf32>
    %19 = math.tanh %18 : vector<16x128xf32>
    %cst_9 = arith.constant 1.000000e+00 : f32
    %20 = vector.broadcast %cst_9 : f32 to vector<16x128xf32>
    %21 = arith.addf %20, %19 : vector<16x128xf32>
    %22 = arith.mulf %11, %21 : vector<16x128xf32>
    %c0_10 = arith.constant 0 : index
    %c0_11 = arith.constant 0 : index
    %23 = vector.load %arg8[%c0_10, %c0_11] : memref<16x128xf32, #tpu.memory_space<vmem>>, vector<16x128xf32>
    %24 = arith.truncf %22 : vector<16x128xf32> to vector<16x128xbf16>
    %c0_12 = arith.constant 0 : index
    %c0_13 = arith.constant 0 : index
    %25 = vector.load %arg5[%c0_12, %c0_13] : memref<128x128xbf16, #tpu.memory_space<vmem>>, vector<128x128xbf16>
    %cst_14 = arith.constant dense<0.000000e+00> : vector<16x128xf32>
    %26 = tpu.matmul %24, %25, %cst_14 {dimension_numbers = #tpu.dot_dimension_numbers<[1], [0], [0], [1], [0, 0, 1, 1], [], []>} : vector<16x128xbf16>, vector<128x128xbf16>, vector<16x128xf32> -> vector<16x128xf32>
    %27 = arith.addf %23, %26 : vector<16x128xf32>
    %c0_15 = arith.constant 0 : index
    %c0_16 = arith.constant 0 : index
    %28 = vector.load %arg8[%c0_15, %c0_16] : memref<16x128xf32, #tpu.memory_space<vmem>>, vector<16x128xf32>
    tpu.vector_store %arg8[%c0_15, %c0_16], %27 {strides = array<i32>} : memref<16x128xf32, #tpu.memory_space<vmem>>, vector<16x128xf32>,
    %c0_i32_17 = arith.constant 0 : i32
    %29 = arith.cmpi eq, %arg1, %c0_i32_17 : i32
    %30 = arith.extui %29 : i1 to i32
    %c0_i32_18 = arith.constant 0 : i32
    %31 = arith.cmpi ne, %30, %c0_i32_18 : i32
    scf.if %31 {
      %c0_19 = arith.constant 0 : index
      %c0_20 = arith.constant 0 : index
      %32 = vector.load %arg8[%c0_19, %c0_20] : memref<16x128xf32, #tpu.memory_space<vmem>>, vector<16x128xf32>
      %c0_21 = arith.constant 0 : index
      %c0_22 = arith.constant 0 : index
      %33 = vector.load %arg6[%c0_21, %c0_22] : memref<1x128xbf16, #tpu.memory_space<vmem>>, vector<1x128xbf16>
      %34 = arith.extf %33 : vector<1x128xbf16> to vector<1x128xf32>
      %35 = vector.broadcast %34 : vector<1x128xf32> to vector<16x128xf32>
      %36 = arith.addf %32, %35 : vector<16x128xf32>
      %37 = arith.truncf %36 : vector<16x128xf32> to vector<16x128xbf16>
      %c0_23 = arith.constant 0 : index
      %c0_24 = arith.constant 0 : index
      %38 = vector.load %arg7[%c0_23, %c0_24] : memref<16x128xbf16, #tpu.memory_space<vmem>>, vector<16x128xbf16>
      tpu.vector_store %arg7[%c0_23, %c0_24], %37 {strides = array<i32>} : memref<16x128xbf16, #tpu.memory_space<vmem>>, vector<16x128xbf16>,
    } else {
    }
    return
  }
  func.func @transform_0(%arg0: i32, %arg1: i32) -> (i32, i32) {
    %c0_i32 = arith.constant 0 : i32
    %c0_i32_0 = arith.constant 0 : i32
    return %arg0, %c0_i32 : i32, i32
  }
  func.func @transform_1(%arg0: i32, %arg1: i32) -> (i32, i32) {
    %c0_i32 = arith.constant 0 : i32
    %c0_i32_0 = arith.constant 0 : i32
    return %c0_i32, %arg1 : i32, i32
  }
  func.func @transform_2(%arg0: i32, %arg1: i32) -> (i32, i32) {
    %c0_i32 = arith.constant 0 : i32
    %c0_i32_0 = arith.constant 0 : i32
    return %c0_i32, %arg1 : i32, i32
  }
  func.func @transform_3(%arg0: i32, %arg1: i32) -> (i32, i32) {
    %c0_i32 = arith.constant 0 : i32
    %c0_i32_0 = arith.constant 0 : i32
    return %arg1, %c0_i32 : i32, i32
  }
  func.func @transform_4(%arg0: i32, %arg1: i32) -> (i32, i32) {
    %c0_i32 = arith.constant 0 : i32
    %c0_i32_0 = arith.constant 0 : i32
    %c0_i32_1 = arith.constant 0 : i32
    return %c0_i32, %c0_i32_0 : i32, i32
  }
  func.func @transform_5(%arg0: i32, %arg1: i32) -> (i32, i32) {
    %c0_i32 = arith.constant 0 : i32
    %c0_i32_0 = arith.constant 0 : i32
    return %arg0, %c0_i32 : i32, i32
  }
}

</mosaic_0001>

<llo_original>
// kernel: _caption_mlp_impl.1
$region0: #{_caption_mlp_impl.1}
  #allocation0 [shape = 'u32[]', space=smem, size = 0x4, offset = 0x4, fixed_abs, tag = 'smem constant byte address 0x4 - core index']
  #allocation1 [shape = 'u32[72,128]{1,0:T(1,128)}', space=vmem, size = 0x9000, scoped, tag = 'internal scratch']
  #allocation2 [shape = 'f32[16,128]{1,0:T(8,128)}', space=vmem, size = 0x2000, scoped, tag = 'scratch operand']
  %s0 = inlined_call_operand.vmem [shape: bf16[16,128], index: 0, kind: input, shape index: {}]
  %s1 = inlined_call_operand.hbm [shape: bf16[128,128], index: 1, kind: input, shape index: {}]
  %s2 = inlined_call_operand.vmem [shape: bf16[1,128], index: 2, kind: input, shape index: {}]
  %s3 = inlined_call_operand.hbm [shape: bf16[128,128], index: 3, kind: input, shape index: {}]
  %s4 = inlined_call_operand.vmem [shape: bf16[1,128], index: 4, kind: input, shape index: {}]
  %s5 = inlined_call_operand.vmem [shape: bf16[16,128], index: 5, kind: output, shape index: {}]
  %s6 = sld [smem:[#allocation0]]
  $region46: #{_caption_mlp_impl.1} parent=0
    _
  %s8 = ssub.s32 1, %s6
  %s9 = scalar_select 0, %s8, %s6
  $region1: #{_caption_mlp_impl.1} parent=0
    #allocation3 [shape = 'u8[32768]{0}', space=vmem, size = 0x8000, scoped, tag = 'input window, operand 1, single buffered']
    #allocation4 [shape = 's32[1]{0}', space=sflag, size = 0x4, scoped, tag = 'scoped memory for _caption_mlp_impl.1']
    #allocation5 [shape = 'u8[32768]{0}', space=vmem, size = 0x8000, scoped, tag = 'input window, operand 3, single buffered']
    #allocation6 [shape = 's32[1]{0}', space=sflag, size = 0x4, scoped, tag = 'scoped memory for _caption_mlp_impl.1']
    %10 = vsyncpa [#allocation4], 0
    %11 = vsyncpa [#allocation6], 0
    // Predicated region
    $region2: #{_caption_mlp_impl.1} parent=1 // pred_check
      _
    $region3: #{_caption_mlp_impl.1} parent=1 // pred_check_branch
      %13 = sbr.rel (0) target = $region5
    $region4: #{_caption_mlp_impl.1} parent=1 // pred_region
      _
    $region5: #{_caption_mlp_impl.1} parent=1 // pred_fallthru
      _
    // Predicated region
    $region6: #{_caption_mlp_impl.1} parent=1 // pred_check
      _
    $region7: #{_caption_mlp_impl.1} parent=1 // pred_check_branch
      %15 = sbr.rel (0) target = $region9
    $region8: #{_caption_mlp_impl.1} parent=1 // pred_region
      %17 = vsyncadd [#allocation4], 0
      %s18 = sshll.u32 %s1, 4
      %s19 = int_to_ptr.hbm [resolvable:$true] %s18
      %s20 = sshll.u32 [#allocation3], 4
      %s21 = int_to_ptr.vmem [resolvable:$true] %s20
      %26 = dma.hbm_to_vmem [thread:$0]  %s19, 1024, %s21, [#allocation4], 64, 64, 4
    $region9: #{_caption_mlp_impl.1} parent=1 // pred_fallthru
      _
    // Predicated region
    $region10: #{_caption_mlp_impl.1} parent=1 // pred_check
      _
    $region11: #{_caption_mlp_impl.1} parent=1 // pred_check_branch
      %28 = sbr.rel (0) target = $region13
    $region12: #{_caption_mlp_impl.1} parent=1 // pred_region
      _
    $region13: #{_caption_mlp_impl.1} parent=1 // pred_fallthru
      _
    // Predicated region
    $region14: #{_caption_mlp_impl.1} parent=1 // pred_check
      _
    $region15: #{_caption_mlp_impl.1} parent=1 // pred_check_branch
      %30 = sbr.rel (0) target = $region17
    $region16: #{_caption_mlp_impl.1} parent=1 // pred_region
      %32 = vsyncadd [#allocation6], 0
      %s33 = sshll.u32 %s3, 4
      %s34 = int_to_ptr.hbm [resolvable:$true] %s33
      %s35 = sshll.u32 [#allocation5], 4
      %s36 = int_to_ptr.vmem [resolvable:$true] %s35
      %41 = dma.hbm_to_vmem [thread:$0]  %s34, 1024, %s36, [#allocation6], 64, 64, 4
    $region17: #{_caption_mlp_impl.1} parent=1 // pred_fallthru
      _
    // Predicated region
    $region18: #{_caption_mlp_impl.1} parent=1 // pred_check
      _
    $region19: #{_caption_mlp_impl.1} parent=1 // pred_check_branch
      %43 = sbr.rel (0) target = $region21
    $region20: #{_caption_mlp_impl.1} parent=1 // pred_region
      _
    $region21: #{_caption_mlp_impl.1} parent=1 // pred_fallthru
      _
    // Predicated region
    $region22: #{_caption_mlp_impl.1} parent=1 // pred_check
      _
    $region23: #{_caption_mlp_impl.1} parent=1 // pred_check_branch
      %45 = sbr.rel (0) target = $region25
    $region24: #{_caption_mlp_impl.1} parent=1 // pred_region
      %47 = dma.done [#allocation4], 1024
    $region25: #{_caption_mlp_impl.1} parent=1 // pred_fallthru
      _
    // Predicated region
    $region26: #{_caption_mlp_impl.1} parent=1 // pred_check
      _
    $region27: #{_caption_mlp_impl.1} parent=1 // pred_check_branch
      %49 = sbr.rel (0) target = $region29
    $region28: #{_caption_mlp_impl.1} parent=1 // pred_region
      %51 = dma.done [#allocation6], 1024
    $region29: #{_caption_mlp_impl.1} parent=1 // pred_fallthru
      _
    %p52 = scmp.eq.s32.totalorder 0, 0
    // Predicated region
    $region30: #{_caption_mlp_impl.1} parent=1 // pred_check
      %p53 = pneg %p52
    $region31: #{_caption_mlp_impl.1} parent=1 // pred_check_branch
      %55 = sbr.rel (%p53) target = $region33
    $region32: #{_caption_mlp_impl.1} parent=1 // pred_region
      %56 = vst [vmem:[#allocation2] sm:$0xff] 0.0
      %57 = vst [vmem:[#allocation2 + $0x8] sm:$0xff] 0.0
    $region33: #{_caption_mlp_impl.1} parent=1 // pred_fallthru
      _
    %v58 = vld [vmem:[%s0] sm:$0xf]
    %v59 = vld [vmem:[%s0 + $0x4] sm:$0xf]
    %v60 = vld [vmem:[#allocation3] sm:$0xf]
    %v61 = vld [vmem:[#allocation3 + $0x4] sm:$0xf]
    %v62 = vld [vmem:[#allocation3 + $0x8] sm:$0xf]
    %v63 = vld [vmem:[#allocation3 + $0xc] sm:$0xf]
    %v64 = vld [vmem:[#allocation3 + $0x10] sm:$0xf]
    %v65 = vld [vmem:[#allocation3 + $0x14] sm:$0xf]
    %v66 = vld [vmem:[#allocation3 + $0x18] sm:$0xf]
    %v67 = vld [vmem:[#allocation3 + $0x1c] sm:$0xf]
    %v68 = vld [vmem:[#allocation3 + $0x20] sm:$0xf]
    %v69 = vld [vmem:[#allocation3 + $0x24] sm:$0xf]
    %v70 = vld [vmem:[#allocation3 + $0x28] sm:$0xf]
    %v71 = vld [vmem:[#allocation3 + $0x2c] sm:$0xf]
    %v72 = vld [vmem:[#allocation3 + $0x30] sm:$0xf]
    %v73 = vld [vmem:[#allocation3 + $0x34] sm:$0xf]
    %v74 = vld [vmem:[#allocation3 + $0x38] sm:$0xf]
    %v75 = vld [vmem:[#allocation3 + $0x3c] sm:$0xf]
    %v76 = vld [vmem:[%s2] sm:$0x1]
    %v77 = vunpack.c.l.bf16 %v76
    %v78 = vperm.slane %v77, 0
    %v81 = vunpack.c.l.b16 %v58
    %v82 = vunpack.c.l.b16 %v59
    %v83 = vpack.c.b16 %v82, %v81
    %v101 = vunpack.c.l.b16 %v60
    %v102 = vunpack.c.l.b16 %v61
    %v103 = vunpack.c.l.b16 %v62
    %v104 = vunpack.c.l.b16 %v63
    %v105 = vunpack.c.l.b16 %v64
    %v106 = vunpack.c.l.b16 %v65
    %v107 = vunpack.c.l.b16 %v66
    %v108 = vunpack.c.l.b16 %v67
    %v109 = vunpack.c.l.b16 %v68
    %v110 = vunpack.c.l.b16 %v69
    %v111 = vunpack.c.l.b16 %v70
    %v112 = vunpack.c.l.b16 %v71
    %v113 = vunpack.c.l.b16 %v72
    %v114 = vunpack.c.l.b16 %v73
    %v115 = vunpack.c.l.b16 %v74
    %v116 = vunpack.c.l.b16 %v75
    %v117 = vpack.c.b16 %v102, %v101
    %v118 = vpack.c.b16 %v104, %v103
    %v119 = vpack.c.b16 %v106, %v105
    %v120 = vpack.c.b16 %v108, %v107
    %v121 = vpack.c.b16 %v110, %v109
    %v122 = vpack.c.b16 %v112, %v111
    %v123 = vpack.c.b16 %v114, %v113
    %v124 = vpack.c.b16 %v116, %v115
    %133 = vmatpush.bf16.msra.mxu0 %v124
    %134 = vmatpush.bf16.msra.mxu0 %v123
    %135 = vmatpush.bf16.msra.mxu0 %v122
    %136 = vmatpush.bf16.msra.mxu0 %v121
    %137 = vmatpush.bf16.msra.mxu0 %v120
    %138 = vmatpush.bf16.msra.mxu0 %v119
    %139 = vmatpush.bf16.msra.mxu0 %v118
    %140 = vmatpush.bf16.msra.mxu0 %v117
    %141 = vmatmul.bf16.gmra.mxu0 %v83
    %v142 = vpop.f32.mrf.mxu0
    %v143 = vadd.f32 %v78, %v142
    %v144 = vpop.f32.mrf.mxu0
    %v145 = vadd.f32 %v78, %v144
    %146 = vdwg.mxu0
    %v147 = vmul.f32 %v143, 0.5
    %v148 = vmul.f32 %v145, 0.5
    %v149 = vmul.f32 %v143, 0.044715
    %v150 = vmul.f32 %v145, 0.044715
    %v151 = vmul.f32 %v149, %v143
    %v152 = vmul.f32 %v150, %v145
    %v153 = vmul.f32 %v151, %v143
    %v154 = vmul.f32 %v152, %v145
    %v155 = vadd.f32 %v143, %v153
    %v156 = vadd.f32 %v145, %v154
    %v157 = vmul.f32 %v155, 0.7978846
    %v158 = vmul.f32 %v156, 0.7978846
    %v159 = vtanh.pop %v157
    %v160 = vtanh.pop %v158
    %v161 = vadd.f32 %v159, 1.0
    %v162 = vadd.f32 %v160, 1.0
    %v163 = vmul.f32 %v147, %v161
    %v164 = vmul.f32 %v148, %v162
    %v165 = vld [vmem:[#allocation2] sm:$0xff]
    %v166 = vld [vmem:[#allocation2 + $0x8] sm:$0xff]
    %v167 = vpack.c.bf16 %v164, %v163
    %v168 = vld [vmem:[#allocation5] sm:$0xf]
    %v169 = vld [vmem:[#allocation5 + $0x4] sm:$0xf]
    %v170 = vld [vmem:[#allocation5 + $0x8] sm:$0xf]
    %v171 = vld [vmem:[#allocation5 + $0xc] sm:$0xf]
    %v172 = vld [vmem:[#allocation5 + $0x10] sm:$0xf]
    %v173 = vld [vmem:[#allocation5 + $0x14] sm:$0xf]
    %v174 = vld [vmem:[#allocation5 + $0x18] sm:$0xf]
    %v175 = vld [vmem:[#allocation5 + $0x1c] sm:$0xf]
    %v176 = vld [vmem:[#allocation5 + $0x20] sm:$0xf]
    %v177 = vld [vmem:[#allocation5 + $0x24] sm:$0xf]
    %v178 = vld [vmem:[#allocation5 + $0x28] sm:$0xf]
    %v179 = vld [vmem:[#allocation5 + $0x2c] sm:$0xf]
    %v180 = vld [vmem:[#allocation5 + $0x30] sm:$0xf]
    %v181 = vld [vmem:[#allocation5 + $0x34] sm:$0xf]
    %v182 = vld [vmem:[#allocation5 + $0x38] sm:$0xf]
    %v183 = vld [vmem:[#allocation5 + $0x3c] sm:$0xf]
    %v200 = vunpack.c.l.b16 %v168
    %v201 = vunpack.c.l.b16 %v169
    %v202 = vunpack.c.l.b16 %v170
    %v203 = vunpack.c.l.b16 %v171
    %v204 = vunpack.c.l.b16 %v172
    %v205 = vunpack.c.l.b16 %v173
    %v206 = vunpack.c.l.b16 %v174
    %v207 = vunpack.c.l.b16 %v175
    %v208 = vunpack.c.l.b16 %v176
    %v209 = vunpack.c.l.b16 %v177
    %v210 = vunpack.c.l.b16 %v178
    %v211 = vunpack.c.l.b16 %v179
    %v212 = vunpack.c.l.b16 %v180
    %v213 = vunpack.c.l.b16 %v181
    %v214 = vunpack.c.l.b16 %v182
    %v215 = vunpack.c.l.b16 %v183
    %v216 = vpack.c.b16 %v201, %v200
    %v217 = vpack.c.b16 %v203, %v202
    %v218 = vpack.c.b16 %v205, %v204
    %v219 = vpack.c.b16 %v207, %v206
    %v220 = vpack.c.b16 %v209, %v208
    %v221 = vpack.c.b16 %v211, %v210
    %v222 = vpack.c.b16 %v213, %v212
    %v223 = vpack.c.b16 %v215, %v214
    %232 = vmatpush.bf16.msra.mxu0 %v223
    %233 = vmatpush.bf16.msra.mxu0 %v222
    %234 = vmatpush.bf16.msra.mxu0 %v221
    %235 = vmatpush.bf16.msra.mxu0 %v220
    %236 = vmatpush.bf16.msra.mxu0 %v219
    %237 = vmatpush.bf16.msra.mxu0 %v218
    %238 = vmatpush.bf16.msra.mxu0 %v217
    %239 = vmatpush.bf16.msra.mxu0 %v216
    %240 = vmatmul.bf16.gmra.mxu0 %v167
    %v241 = vpop.f32.mrf.mxu0
    %v242 = vadd.f32 0.0, %v241
    %v243 = vpop.f32.mrf.mxu0
    %v244 = vadd.f32 0.0, %v243
    %245 = vdwg.mxu0
    %v246 = vadd.f32 %v165, %v242
    %v247 = vadd.f32 %v166, %v244
    %248 = vst [vmem:[#allocation2] sm:$0xff] %v246
    %249 = vst [vmem:[#allocation2 + $0x8] sm:$0xff] %v247
    // Predicated region
    $region34: #{_caption_mlp_impl.1} parent=1 // pred_check
      %p250 = pneg %p52
    $region35: #{_caption_mlp_impl.1} parent=1 // pred_check_branch
      %252 = sbr.rel (%p250) target = $region37
    $region36: #{_caption_mlp_impl.1} parent=1 // pred_region
      %v253 = vld [vmem:[#allocation2] sm:$0xff]
      %v254 = vld [vmem:[#allocation2 + $0x8] sm:$0xff]
      %v255 = vld [vmem:[%s4] sm:$0x1]
      %v256 = vunpack.c.l.bf16 %v255
      %v257 = vperm.slane %v256, 0
      %v258 = vadd.f32 %v253, %v257
      %v259 = vadd.f32 %v254, %v257
      %v260 = vpack.c.bf16 %v258, %v258
      %v261 = vpack.c.bf16 %v259, %v259
      %262 = vst [vmem:[%s5] sm:$0xf] %v260
      %263 = vst [vmem:[%s5 + $0x4] sm:$0xf] %v261
    $region37: #{_caption_mlp_impl.1} parent=1 // pred_fallthru
      _
    // Predicated region
    $region38: #{_caption_mlp_impl.1} parent=1 // pred_check
      _
    $region39: #{_caption_mlp_impl.1} parent=1 // pred_check_branch
      %265 = sbr.rel (0) target = $region41
    $region40: #{_caption_mlp_impl.1} parent=1 // pred_region
      _
    $region41: #{_caption_mlp_impl.1} parent=1 // pred_fallthru
      _
    // Predicated region
    $region42: #{_caption_mlp_impl.1} parent=1 // pred_check
      _
    $region43: #{_caption_mlp_impl.1} parent=1 // pred_check_branch
      %267 = sbr.rel (0) target = $region45
    $region44: #{_caption_mlp_impl.1} parent=1 // pred_region
      _
    $region45: #{_caption_mlp_impl.1} parent=1 // pred_fallthru
      _
    %268 = vsyncpa [#allocation4], 1
    %269 = vsyncpa [#allocation6], 1

</llo_original>
